<compile_context>
chip_gen: v7x
topology: tpu7x:2x2x1
jax: 0.10.0
libtpu: 0.0.40
codegen_flags: <defaults>
</compile_context>

<pallas_src>
import functools

import jax
import jax.numpy as jnp
from jax.experimental import pallas as pl
from jax.experimental.pallas import tpu as pltpu


def _round_up(x: int, m: int) -> int:
    return ((x + m - 1) // m) * m


def _cdiv(a: int, b: int) -> int:
    return (a + b - 1) // b


# ---------------------------------------------------------------------------
# Kernel
# ---------------------------------------------------------------------------
def batch_label_encoder_kernel(idx_ref, table_ref, gamma_ref, beta_ref, o_ref,
                               *, d_true: int, eps: float):
    """Fused embedding gather (one-hot @ table on the MXU) + LayerNorm.

    idx_ref   : (tm, 1)            int32 row indices
    table_ref : (num_emb, d_pad)   embedding table (zero-padded past d_true)
    gamma_ref : (1, d_pad)         LayerNorm weight (zero-padded past d_true)
    beta_ref  : (1, d_pad)         LayerNorm bias   (zero-padded past d_true)
    o_ref     : (tm, d_pad)        output tile
    """
    ids = idx_ref[...]                                     # (tm, 1) int32
    tm = ids.shape[0]
    n_emb = table_ref.shape[0]

    # Exact row selection as a one-hot matmul on the MXU; cost is bounded by
    # the (tm x d_pad) result tiles, not the tiny contraction dim.
    onehot = (ids == jax.lax.broadcasted_iota(jnp.int32, (tm, n_emb), 1))
    onehot = onehot.astype(table_ref.dtype)
    emb = jnp.dot(onehot, table_ref[...],
                  preferred_element_type=jnp.float32)      # (tm, d_pad) f32

    # LayerNorm over the TRUE feature width.  Padded feature columns of `emb`
    # are exactly zero (the table is zero-padded), so they contribute nothing
    # to sum(x) or sum(x*x); E[x^2] - mean^2 needs no iota/where mask and no
    # second full elementwise pass.
    inv_d = jnp.float32(1.0 / d_true)
    mean = jnp.sum(emb, axis=-1, keepdims=True) * inv_d
    ex2 = jnp.sum(emb * emb, axis=-1, keepdims=True) * inv_d
    var = jnp.maximum(ex2 - mean * mean, jnp.float32(0.0))
    inv_std = jax.lax.rsqrt(var + jnp.float32(eps))

    # Padded output columns come out exactly 0 (gamma = beta = 0 there); the
    # wrapper slices them away.
    y = (emb - mean) * inv_std * gamma_ref[...].astype(jnp.float32) \
        + beta_ref[...].astype(jnp.float32)
    o_ref[...] = y.astype(o_ref.dtype)


# ---------------------------------------------------------------------------
# Parameters
# ---------------------------------------------------------------------------
def init_params(key, num_embeddings, embedding_dim, padding_idx=None,
                dtype=jnp.float32):
    """Mirror nn.Embedding (N(0,1) init) + nn.LayerNorm (gamma=1, beta=0)."""
    table = jax.random.normal(key, (num_embeddings, embedding_dim), dtype)
    if padding_idx is not None:
        table = table.at[padding_idx].set(0.0)
    gamma = jnp.ones((embedding_dim,), dtype)
    beta = jnp.zeros((embedding_dim,), dtype)
    return dict(embedding=table, gamma=gamma, beta=beta)


def prepare_params(params, table_dtype=None):
    """Pad parameters ONCE to a lane-dense (multiple of 128) feature dim.

    Doing this at setup time removes all per-call parameter copies from the
    forward wrapper.  `table_dtype=jnp.bfloat16` halves the resident table and
    puts the gather matmul on the native bf16 MXU path; LayerNorm math stays
    in f32 and the output keeps the original parameter dtype.
    """
    table = params["embedding"]
    gamma = params["gamma"]
    beta = params["beta"]
    num_emb, d = table.shape
    out_dtype = gamma.dtype
    if table_dtype is None:
        table_dtype = table.dtype

    d_pad = _round_up(max(d, 1), 128)
    if d_pad == d:  # statically skip the pad/copy path
        table_p = table.astype(table_dtype)
        gamma_p = gamma.astype(out_dtype).reshape(1, d_pad)
        beta_p = beta.astype(out_dtype).reshape(1, d_pad)
    else:
        table_p = (jnp.zeros((num_emb, d_pad), table_dtype)
                   .at[:, :d].set(table.astype(table_dtype)))
        gamma_p = (jnp.zeros((1, d_pad), out_dtype)
                   .at[0, :d].set(gamma.astype(out_dtype)))
        beta_p = (jnp.zeros((1, d_pad), out_dtype)
                  .at[0, :d].set(beta.astype(out_dtype)))
    return dict(table=table_p, gamma=gamma_p, beta=beta_p, d=int(d))


# ---------------------------------------------------------------------------
# Forward
# ---------------------------------------------------------------------------
@functools.partial(jax.jit, static_argnames=("d_true", "tm", "eps"))
def _fused_embed_layernorm(idx, table_p, gamma_p, beta_p, *, d_true, tm, eps):
    n_rows = idx.shape[0]
    num_emb, d_pad = table_p.shape
    out_dtype = gamma_p.dtype
    out_bytes = jnp.dtype(out_dtype).itemsize
    tbl_bytes = jnp.dtype(table_p.dtype).itemsize

    # ---- Row tiling -------------------------------------------------------
    # Big tiles amortize the ~0.35 us per-grid-step pipeline cost; cap so the
    # double-buffered output block stays ~2 MiB (fits every generation's
    # scoped-VMEM budget alongside the f32 intermediates).
    tm = max(8, _round_up(tm, 8))
    tm = min(tm, max(256, ((2 << 20) // max(d_pad * out_bytes, 1)) // 8 * 8))
    # Balanced tiling: row padding <= 7 rows per tile; when enough rows, use
    # >=2 tiles so the "parallel" axis can shard across v7x's 2 TensorCores.
    num_tiles = _cdiv(n_rows, tm)
    if n_rows >= 16:
        num_tiles = max(num_tiles, 2)
    tm_eff = _round_up(_cdiv(n_rows, num_tiles), 8)
    rows_pad = num_tiles * tm_eff

    idx = idx.astype(jnp.int32)
    if rows_pad != n_rows:
        idx = jnp.pad(idx, (0, rows_pad - n_rows))   # pad with index 0 (valid)
    idx2d = idx.reshape(rows_pad, 1)

    # ---- Explicit VMEM budget (v5e's default scoped limit is only 16 MiB) --
    est = (num_emb * d_pad * tbl_bytes                      # resident table
           + 2 * d_pad * out_bytes                          # gamma + beta
           + 2 * tm_eff * (num_emb * tbl_bytes + 4)         # one-hot + idx
           + 2 * tm_eff * d_pad * out_bytes                 # output (dbl-buf)
           + 4 * tm_eff * d_pad * 4)                        # f32 intermediates
    vmem_limit = int(min(max(2 * est + (1 << 20), 32 << 20), 64 << 20))

    const = lambda i: (0, 0)
    out = pl.pallas_call(
        functools.partial(batch_label_encoder_kernel, d_true=d_true, eps=eps),
        out_shape=jax.ShapeDtypeStruct((rows_pad, d_pad), out_dtype),
        grid=(num_tiles,),
        in_specs=[
            pl.BlockSpec((tm_eff, 1), lambda i: (i, 0)),       # index row tile
            # Grid-invariant operands: single-buffered (no wasted 2nd buffer).
            pl.BlockSpec((num_emb, d_pad), const, pipeline_mode=pl.Buffered(1)),
            pl.BlockSpec((1, d_pad), const, pipeline_mode=pl.Buffered(1)),
            pl.BlockSpec((1, d_pad), const, pipeline_mode=pl.Buffered(1)),
        ],
        out_specs=pl.BlockSpec((tm_eff, d_pad), lambda i: (i, 0)),
        compiler_params=pltpu.CompilerParams(
            dimension_semantics=("parallel",),
            vmem_limit_bytes=vmem_limit),
    )(idx2d, table_p, gamma_p, beta_p)

    if rows_pad != n_rows or d_pad != d_true:
        out = out[:n_rows, :d_true]
    return out


def batch_label_encoder_forward(x, prepared, *, tm: int = 1024,
                                eps: float = 1e-5):
    """x: integer indices of any shape -> (*x.shape, embedding_dim)."""
    d = prepared["d"]
    idx_shape = x.shape
    out = _fused_embed_layernorm(
        x.reshape(-1), prepared["table"], prepared["gamma"], prepared["beta"],
        d_true=d, tm=tm, eps=eps)
    return out.reshape(*idx_shape, d)


# ---------------------------------------------------------------------------
# Pure-JAX reference (exact gather + LayerNorm, mirrors the PyTorch module)
# ---------------------------------------------------------------------------
def reference_forward(x, params, eps=1e-5):
    emb = params["embedding"][x]
    mean = emb.mean(axis=-1, keepdims=True)
    var = ((emb - mean) ** 2).mean(axis=-1, keepdims=True)
    return (emb - mean) / jnp.sqrt(var + eps) * params["gamma"] + params["beta"]


if __name__ == "__main__":
    num_embeddings, embedding_dim = 16, 32
    batch, seq = 2, 8

    key = jax.random.PRNGKey(0)
    k_idx, k_p = jax.random.split(key)

    x = jax.random.randint(k_idx, (batch, seq), 0, num_embeddings,
                           dtype=jnp.int32)
    params = init_params(k_p, num_embeddings, embedding_dim, padding_idx=0)

    ref = reference_forward(x, params)

    # f32 table: gather is exact and LayerNorm is f32 -> tight tolerance.
    prepared = prepare_params(params)
    out = jax.block_until_ready(batch_label_encoder_forward(x, prepared))
    assert out.shape == (batch, seq, embedding_dim)
    assert jnp.allclose(out, ref, atol=1e-4, rtol=1e-4), "f32 mismatch vs ref"

    # bf16 resident table (native MXU path); only the stored values round.
    prepared_bf16 = prepare_params(params, table_dtype=jnp.bfloat16)
    out_bf16 = jax.block_until_ready(
        batch_label_encoder_forward(x, prepared_bf16))
    assert jnp.allclose(out_bf16, ref, atol=3e-2, rtol=3e-2), \
        "bf16 mismatch vs ref"

    # Ragged row count: exercises row-padding / balanced-tiling path.
    x2 = jax.random.randint(k_idx, (3, 5), 0, num_embeddings, dtype=jnp.int32)
    out2 = jax.block_until_ready(batch_label_encoder_forward(x2, prepared))
    assert jnp.allclose(out2, reference_forward(x2, params),
                        atol=1e-4, rtol=1e-4), "ragged mismatch vs ref"

    print("KERNEL_OK")
</pallas_src>

<mosaic_0001>
module attributes {stable_mosaic.version = 11 : i64} {
  func.func @batch_label_encoder_kernel(%arg0: i32, %arg1: memref<8x1xi32, #tpu.memory_space<vmem>>, %arg2: memref<16x128xf32, #tpu.memory_space<vmem>>, %arg3: memref<1x128xf32, #tpu.memory_space<vmem>>, %arg4: memref<1x128xf32, #tpu.memory_space<vmem>>, %arg5: memref<8x128xf32, #tpu.memory_space<vmem>>) attributes {dimension_semantics = [#tpu.dimension_semantics<parallel>], iteration_bounds = array<i64: 2>, scalar_prefetch = 0 : i64, scratch_operands = 0 : i64, tpu.core_type = #tpu.core_type<tc>, window_params = [{transform_indices = @transform_0, window_bounds = array<i64: 8, 1>}, {pipeline_mode = #tpu.pipeline_mode<synchronous>, transform_indices = @transform_1, window_bounds = array<i64: 16, 128>}, {pipeline_mode = #tpu.pipeline_mode<synchronous>, transform_indices = @transform_2, window_bounds = array<i64: 1, 128>}, {pipeline_mode = #tpu.pipeline_mode<synchronous>, transform_indices = @transform_3, window_bounds = array<i64: 1, 128>}, {transform_indices = @transform_4, window_bounds = array<i64: 8, 128>}]} {
    %c0 = arith.constant 0 : index
    %c0_0 = arith.constant 0 : index
    %0 = vector.load %arg1[%c0, %c0_0] : memref<8x1xi32, #tpu.memory_space<vmem>>, vector<8x1xi32>
    %1 = tpu.iota {dimensions = array<i32: 1>} : vector<8x16xi32>
    %2 = vector.broadcast %0 : vector<8x1xi32> to vector<8x16xi32>
    %3 = arith.cmpi eq, %2, %1 : vector<8x16xi32>
    %4 = arith.extui %3 : vector<8x16xi1> to vector<8x16xi32>
    %5 = arith.sitofp %4 : vector<8x16xi32> to vector<8x16xf32>
    %c0_1 = arith.constant 0 : index
    %c0_2 = arith.constant 0 : index
    %6 = vector.load %arg2[%c0_1, %c0_2] : memref<16x128xf32, #tpu.memory_space<vmem>>, vector<16x128xf32>
    %cst = arith.constant dense<0.000000e+00> : vector<8x128xf32>
    %7 = tpu.matmul %5, %6, %cst {dimension_numbers = #tpu.dot_dimension_numbers<[1], [0], [0], [1], [0, 0, 1, 1], [], []>} : vector<8x16xf32>, vector<16x128xf32>, vector<8x128xf32> -> vector<8x128xf32>
    %cst_3 = arith.constant dense<0.000000e+00> : vector<8xf32>
    %8 = vector.multi_reduction <add>, %7, %cst_3 [1] : vector<8x128xf32> to vector<8xf32>
    %9 = vector.shape_cast %8 : vector<8xf32> to vector<8x1xf32>
    %cst_4 = arith.constant 3.125000e-02 : f32
    %10 = vector.broadcast %cst_4 : f32 to vector<8x1xf32>
    %11 = arith.mulf %9, %10 : vector<8x1xf32>
    %12 = arith.mulf %7, %7 : vector<8x128xf32>
    %cst_5 = arith.constant dense<0.000000e+00> : vector<8xf32>
    %13 = vector.multi_reduction <add>, %12, %cst_5 [1] : vector<8x128xf32> to vector<8xf32>
    %14 = vector.shape_cast %13 : vector<8xf32> to vector<8x1xf32>
    %cst_6 = arith.constant 3.125000e-02 : f32
    %15 = vector.broadcast %cst_6 : f32 to vector<8x1xf32>
    %16 = arith.mulf %14, %15 : vector<8x1xf32>
    %17 = arith.mulf %11, %11 : vector<8x1xf32>
    %18 = arith.subf %16, %17 : vector<8x1xf32>
    %cst_7 = arith.constant 0.000000e+00 : f32
    %19 = vector.broadcast %cst_7 : f32 to vector<8x1xf32>
    %20 = arith.maximumf %18, %19 : vector<8x1xf32>
    %cst_8 = arith.constant 9.99999974E-6 : f32
    %21 = vector.broadcast %cst_8 : f32 to vector<8x1xf32>
    %22 = arith.addf %20, %21 : vector<8x1xf32>
    %23 = math.rsqrt %22 : vector<8x1xf32>
    %24 = vector.broadcast %11 : vector<8x1xf32> to vector<8x128xf32>
    %25 = arith.subf %7, %24 : vector<8x128xf32>
    %26 = vector.broadcast %23 : vector<8x1xf32> to vector<8x128xf32>
    %27 = arith.mulf %25, %26 : vector<8x128xf32>
    %c0_9 = arith.constant 0 : index
    %c0_10 = arith.constant 0 : index
    %28 = vector.load %arg3[%c0_9, %c0_10] : memref<1x128xf32, #tpu.memory_space<vmem>>, vector<1x128xf32>
    %29 = vector.broadcast %28 : vector<1x128xf32> to vector<8x128xf32>
    %30 = arith.mulf %27, %29 : vector<8x128xf32>
    %c0_11 = arith.constant 0 : index
    %c0_12 = arith.constant 0 : index
    %31 = vector.load %arg4[%c0_11, %c0_12] : memref<1x128xf32, #tpu.memory_space<vmem>>, vector<1x128xf32>
    %32 = vector.broadcast %31 : vector<1x128xf32> to vector<8x128xf32>
    %33 = arith.addf %30, %32 : vector<8x128xf32>
    %c0_13 = arith.constant 0 : index
    %c0_14 = arith.constant 0 : index
    %34 = vector.load %arg5[%c0_13, %c0_14] : memref<8x128xf32, #tpu.memory_space<vmem>>, vector<8x128xf32>
    tpu.vector_store %arg5[%c0_13, %c0_14], %33 {strides = array<i32>} : memref<8x128xf32, #tpu.memory_space<vmem>>, vector<8x128xf32>,
    return
  }
  func.func @transform_0(%arg0: i32) -> (i32, i32) {
    %c0_i32 = arith.constant 0 : i32
    %c0_i32_0 = arith.constant 0 : i32
    return %arg0, %c0_i32 : i32, i32
  }
  func.func @transform_1(%arg0: i32) -> (i32, i32) {
    %c0_i32 = arith.constant 0 : i32
    %c0_i32_0 = arith.constant 0 : i32
    %c0_i32_1 = arith.constant 0 : i32
    return %c0_i32, %c0_i32_0 : i32, i32
  }
  func.func @transform_2(%arg0: i32) -> (i32, i32) {
    %c0_i32 = arith.constant 0 : i32
    %c0_i32_0 = arith.constant 0 : i32
    %c0_i32_1 = arith.constant 0 : i32
    return %c0_i32, %c0_i32_0 : i32, i32
  }
  func.func @transform_3(%arg0: i32) -> (i32, i32) {
    %c0_i32 = arith.constant 0 : i32
    %c0_i32_0 = arith.constant 0 : i32
    %c0_i32_1 = arith.constant 0 : i32
    return %c0_i32, %c0_i32_0 : i32, i32
  }
  func.func @transform_4(%arg0: i32) -> (i32, i32) {
    %c0_i32 = arith.constant 0 : i32
    %c0_i32_0 = arith.constant 0 : i32
    return %arg0, %c0_i32 : i32, i32
  }
}

</mosaic_0001>

<llo_original>
// kernel: _fused_embed_layernorm.1
$region0: #{_fused_embed_layernorm.1}
  #allocation0 [shape = 'u32[]', space=smem, size = 0x4, offset = 0x4, fixed_abs, tag = 'smem constant byte address 0x4 - core index']
  #allocation1 [shape = 'u32[144,128]{1,0:T(1,128)}', space=vmem, size = 0x12000, scoped, tag = 'internal scratch']
  %s0 = inlined_call_operand.vmem [shape: s32[16,1], index: 0, kind: input, shape index: {}]
  %s1 = inlined_call_operand.vmem [shape: f32[16,128], index: 1, kind: input, shape index: {}]
  %s2 = inlined_call_operand.vmem [shape: f32[1,128], index: 2, kind: input, shape index: {}]
  %s3 = inlined_call_operand.vmem [shape: f32[1,128], index: 3, kind: input, shape index: {}]
  %s4 = inlined_call_operand.hbm [shape: f32[16,128], index: 4, kind: output, shape index: {}]
  %s5 = sld [smem:[#allocation0]]
  $region49: #{_fused_embed_layernorm.1} parent=0
    _
  %s7 = ssub.s32 1, %s5
  %s8 = scalar_select 0, %s7, %s5
  $region1: #{_fused_embed_layernorm.1} parent=0
    #allocation2 [shape = 'u8[8192]{0}', space=vmem, size = 0x2000, scoped, tag = 'output window, operand 0']
    #allocation3 [shape = 's32[2]{0}', space=sflag, size = 0x8, scoped, tag = 'scoped memory for _fused_embed_layernorm.1']
    %9 = vsyncpa [#allocation3], 0
    %s10 = scalar_lea.sflag [#allocation3], 1
    %11 = vsyncpa %s10, 0
    loop: start=0, step=1, limit=4
    $region2: #{_fused_embed_layernorm.1} parent=1 // loop_pre_header
      _
    $region3: #{_fused_embed_layernorm.1} parent=1 // loop_header
      %s13 = sphi 0, %s17
      %p14 = scmp.ge.s32.totalorder %s13, 4
      %s23 = sphi 0, %s25
      %s26 = sphi 0, %s23
      %s27 = sphi 0, %s26
      %s43 = sphi 0, %s27
      %s47 = sphi 0, %s47
      %s49 = sphi 0, %s47
      %s50 = sphi 0, %s49
      %s64 = sphi 0, %s50
      %s68 = sphi 0, %s68
      %s70 = sphi 0, %s68
      %s71 = sphi 0, %s70
      %s85 = sphi 0, %s71
      %s89 = sphi 0, %s89
      %s91 = sphi 0, %s89
      %s92 = sphi 0, %s91
      %s106 = sphi 0, %s92
      %s112 = sphi 0, %s114
      %s115 = sphi 0, %s112
      %s116 = sphi 0, %s115
      %s132 = sphi 0, %s116
    $region4: #{_fused_embed_layernorm.1} parent=1 // loop_header_branch
      %16 = sbr.rel (%p14) target = $region8
    $region5: #{_fused_embed_layernorm.1} parent=1 // loop_body
      %s18 = ssub.s32 %s13, 1
      %s19 = ssub.s32 %s13, 2
      %s20 = sadd.s32 %s13, 1
      %s21 = ssub.s32 %s13, %s20
      %p22 = scmp.eq.s32.totalorder %s21, 0
      %s24 = sadd.s32 %s23, 1
      %s25 = scalar_select %p22, %s23, %s24
      %p28 = pneg %p22
      %p29 = scmp.eq.s32.totalorder %s13, 1
      %p30 = por %p28, %p29
      %p31 = scmp.ne.s32.totalorder %s23, %s26
      %p32 = scmp.eq.s32.totalorder %s13, 0
      %p33 = por %p31, %p32
      %p34 = scmp.ne.s32.totalorder %s23, %s26
      %p35 = scmp.eq.s32.totalorder %s18, 1
      %p36 = por %p34, %p35
      %p37 = scmp.ne.s32.totalorder %s26, %s27
      %p38 = scmp.eq.s32.totalorder %s18, 0
      %p39 = por %p37, %p38
      %p40 = scmp.ne.s32.totalorder %s26, %s27
      %p41 = scmp.eq.s32.totalorder %s19, 1
      %p42 = por %p40, %p41
      %p44 = scmp.ne.s32.totalorder %s27, %s43
      %p45 = scmp.eq.s32.totalorder %s19, 0
      %p46 = por %p44, %p45
      %s48 = sadd.s32 %s47, 1
      %p51 = scmp.eq.s32.totalorder %s13, 1
      %p52 = scmp.ne.s32.totalorder %s47, %s49
      %p53 = scmp.eq.s32.totalorder %s13, 0
      %p54 = por %p52, %p53
      %p55 = scmp.ne.s32.totalorder %s47, %s49
      %p56 = scmp.eq.s32.totalorder %s18, 1
      %p57 = por %p55, %p56
      %p58 = scmp.ne.s32.totalorder %s49, %s50
      %p59 = scmp.eq.s32.totalorder %s18, 0
      %p60 = por %p58, %p59
      %p61 = scmp.ne.s32.totalorder %s49, %s50
      %p62 = scmp.eq.s32.totalorder %s19, 1
      %p63 = por %p61, %p62
      %p65 = scmp.ne.s32.totalorder %s50, %s64
      %p66 = scmp.eq.s32.totalorder %s19, 0
      %p67 = por %p65, %p66
      %s69 = sadd.s32 %s68, 1
      %p72 = scmp.eq.s32.totalorder %s13, 1
      %p73 = scmp.ne.s32.totalorder %s68, %s70
      %p74 = scmp.eq.s32.totalorder %s13, 0
      %p75 = por %p73, %p74
      %p76 = scmp.ne.s32.totalorder %s68, %s70
      %p77 = scmp.eq.s32.totalorder %s18, 1
      %p78 = por %p76, %p77
      %p79 = scmp.ne.s32.totalorder %s70, %s71
      %p80 = scmp.eq.s32.totalorder %s18, 0
      %p81 = por %p79, %p80
      %p82 = scmp.ne.s32.totalorder %s70, %s71
      %p83 = scmp.eq.s32.totalorder %s19, 1
      %p84 = por %p82, %p83
      %p86 = scmp.ne.s32.totalorder %s71, %s85
      %p87 = scmp.eq.s32.totalorder %s19, 0
      %p88 = por %p86, %p87
      %s90 = sadd.s32 %s89, 1
      %p93 = scmp.eq.s32.totalorder %s13, 1
      %p94 = scmp.ne.s32.totalorder %s89, %s91
      %p95 = scmp.eq.s32.totalorder %s13, 0
      %p96 = por %p94, %p95
      %p97 = scmp.ne.s32.totalorder %s89, %s91
      %p98 = scmp.eq.s32.totalorder %s18, 1
      %p99 = por %p97, %p98
      %p100 = scmp.ne.s32.totalorder %s91, %s92
      %p101 = scmp.eq.s32.totalorder %s18, 0
      %p102 = por %p100, %p101
      %p103 = scmp.ne.s32.totalorder %s91, %s92
      %p104 = scmp.eq.s32.totalorder %s19, 1
      %p105 = por %p103, %p104
      %p107 = scmp.ne.s32.totalorder %s92, %s106
      %p108 = scmp.eq.s32.totalorder %s19, 0
      %p109 = por %p107, %p108
      %s110 = ssub.s32 %s13, %s20
      %p111 = scmp.eq.s32.totalorder %s110, 0
      %s113 = sadd.s32 %s112, 1
      %s114 = scalar_select %p111, %s112, %s113
      %p117 = pneg %p111
      %p118 = scmp.eq.s32.totalorder %s13, 1
      %p119 = por %p117, %p118
      %p120 = scmp.ne.s32.totalorder %s112, %s115
      %p121 = scmp.eq.s32.totalorder %s13, 0
      %p122 = por %p120, %p121
      %p123 = scmp.ne.s32.totalorder %s112, %s115
      %p124 = scmp.eq.s32.totalorder %s18, 1
      %p125 = por %p123, %p124
      %p126 = scmp.ne.s32.totalorder %s115, %s116
      %p127 = scmp.eq.s32.totalorder %s18, 0
      %p128 = por %p126, %p127
      %p129 = scmp.ne.s32.totalorder %s115, %s116
      %p130 = scmp.eq.s32.totalorder %s19, 1
      %p131 = por %p129, %p130
      %p133 = scmp.ne.s32.totalorder %s116, %s132
      %p134 = scmp.eq.s32.totalorder %s19, 0
      %p135 = por %p133, %p134
      %p136 = scmp.le.s32.totalorder 1, %s13
      %p137 = scmp.lt.s32.totalorder %s13, 3
      %p138 = pnand %p136, %p137
      %p139 = pneg %p138
      // Predicated region
      $region9: #{_fused_embed_layernorm.1} parent=5 // pred_check
        _
      $region10: #{_fused_embed_layernorm.1} parent=5 // pred_check_branch
        %141 = sbr.rel (%p138) target = $region12
      $region11: #{_fused_embed_layernorm.1} parent=5 // pred_region
        %s142 = ssub.s32 %s13, 1
        // Predicated region
        $region13: #{_fused_embed_layernorm.1} parent=11 // pred_check
          %p143 = pneg %p60
        $region14: #{_fused_embed_layernorm.1} parent=11 // pred_check_branch
          %145 = sbr.rel (%p143) target = $region16
        $region15: #{_fused_embed_layernorm.1} parent=11 // pred_region
          _
        $region16: #{_fused_embed_layernorm.1} parent=11 // pred_fallthru
          _
        // Predicated region
        $region17: #{_fused_embed_layernorm.1} parent=11 // pred_check
          %p146 = pneg %p81
        $region18: #{_fused_embed_layernorm.1} parent=11 // pred_check_branch
          %148 = sbr.rel (%p146) target = $region20
        $region19: #{_fused_embed_layernorm.1} parent=11 // pred_region
          _
        $region20: #{_fused_embed_layernorm.1} parent=11 // pred_fallthru
          _
        // Predicated region
        $region21: #{_fused_embed_layernorm.1} parent=11 // pred_check
          %p149 = pneg %p102
        $region22: #{_fused_embed_layernorm.1} parent=11 // pred_check_branch
          %151 = sbr.rel (%p149) target = $region24
        $region23: #{_fused_embed_layernorm.1} parent=11 // pred_region
          _
        $region24: #{_fused_embed_layernorm.1} parent=11 // pred_fallthru
          _
      $region12: #{_fused_embed_layernorm.1} parent=5 // pred_fallthru
        _
      %p152 = scmp.lt.s32.totalorder %s13, 2
      // Predicated region
      $region25: #{_fused_embed_layernorm.1} parent=5 // pred_check
        %p153 = pneg %p152
      $region26: #{_fused_embed_layernorm.1} parent=5 // pred_check_branch
        %155 = sbr.rel (%p153) target = $region28
      $region27: #{_fused_embed_layernorm.1} parent=5 // pred_region
        // Predicated region
        $region29: #{_fused_embed_layernorm.1} parent=27 // pred_check
          %p156 = pneg %p33
        $region30: #{_fused_embed_layernorm.1} parent=27 // pred_check_branch
          %158 = sbr.rel (%p156) target = $region32
        $region31: #{_fused_embed_layernorm.1} parent=27 // pred_region
          %p159 = scmp.lt.s32.totalorder %s13, 1
          %s160 = scalar_select %p159, %s13, 1
          %s161 = smul.addr %s160, 8
          %s162 = scalar_lea.vmem %s0, %s161
        $region32: #{_fused_embed_layernorm.1} parent=27 // pred_fallthru
          _
      $region28: #{_fused_embed_layernorm.1} parent=5 // pred_fallthru
        _
      %p163 = scmp.le.s32.totalorder 1, %s13
      %p164 = scmp.lt.s32.totalorder %s13, 3
      %p165 = pnand %p163, %p164
      %p166 = pneg %p165
      // Predicated region
      $region33: #{_fused_embed_layernorm.1} parent=5 // pred_check
        _
      $region34: #{_fused_embed_layernorm.1} parent=5 // pred_check_branch
        %168 = sbr.rel (%p165) target = $region36
      $region35: #{_fused_embed_layernorm.1} parent=5 // pred_region
        %s169 = ssub.s32 %s13, 1
        %p170 = scmp.lt.s32.totalorder %s18, 1
        %s171 = scalar_select %p170, %s18, 1
        %s172 = smul.addr %s171, 8
        %s173 = scalar_lea.vmem %s0, %s172
        %p174 = pneg %p39
        %p175 = pneg %p36
        %p176 = pneg %p60
        %p177 = pneg %p57
        %p178 = pneg %p81
        %p179 = pneg %p78
        %p180 = pneg %p102
        %p181 = pneg %p99
        %p182 = pneg %p128
        %p183 = pneg %p125
        %s184 = sand.u32 %s115, 1
        %s185 = scalar_lea.sflag [#allocation3], %s184
        %s186 = sand.u32 %s115, 1
        %s187 = smul.addr %s186, 8
        %s188 = scalar_lea.vmem [#allocation2], %s187
        %p189 = scmp.lt.s32.totalorder %s18, 1
        %s190 = scalar_select %p189, %s18, 1
        %s191 = smul.addr %s190, 8
        %s192 = scalar_lea.vmem %s0, %s191
        %v193 = vld [vmem:[%s192] sm:$0xff]
        %v194 = vlaneseq
        %v195 = vand.u32 %v194, 127
        %196 = vset.pattern.permute.xlu0 0
        %197 = vperm.xlu0 %196, %v193
        %v198 = vpop.permute.xlu0 %197
        %vm199 = vcmp.eq.s32.totalorder %v198, %v195
        %v200 = vsel %vm199, 1, 0
        %v201 = vcvt.s32.f32 %v200
        %v202 = vld [vmem:[%s1] sm:$0xff]
        %v203 = vld [vmem:[%s1 + $0x8] sm:$0xff]
        %vm204 = vcmask 130048
        %v206 = vsel %vm204, %v201, 0
        %208 = vmatprep.subr.mxu0 0.0
        %209 = vmatpush1.msra.mxu0 %v202
        %210 = vmatprep.subr.mxu0 0.0
        %211 = vmatpush1.msra.mxu0 %v203
        %212 = vmatprep.subr.mxu0 0.0
        %213 = vmatpush1.msra.mxu0 0.0
        %214 = vmatprep.subr.mxu0 0.0
        %215 = vmatpush1.msra.mxu0 0.0
        %216 = vmatprep.subr.mxu0 0.0
        %217 = vmatpush1.msra.mxu0 0.0
        %218 = vmatprep.subr.mxu0 0.0
        %219 = vmatpush1.msra.mxu0 0.0
        %220 = vmatprep.subr.mxu0 0.0
        %221 = vmatpush1.msra.mxu0 0.0
        %222 = vmatprep.subr.mxu0 0.0
        %223 = vmatpush1.msra.mxu0 0.0
        %224 = vmatprep.subr.mxu0 0.0
        %225 = vmatpush1.msra.mxu0 0.0
        %226 = vmatprep.subr.mxu0 0.0
        %227 = vmatpush1.msra.mxu0 0.0
        %228 = vmatprep.subr.mxu0 0.0
        %229 = vmatpush1.msra.mxu0 0.0
        %230 = vmatprep.subr.mxu0 0.0
        %231 = vmatpush1.msra.mxu0 0.0
        %232 = vmatprep.subr.mxu0 0.0
        %233 = vmatpush1.msra.mxu0 0.0
        %234 = vmatprep.subr.mxu0 0.0
        %235 = vmatpush1.msra.mxu0 0.0
        %236 = vmatprep.subr.mxu0 0.0
        %237 = vmatpush1.msra.mxu0 0.0
        %238 = vmatprep.subr.mxu0 0.0
        %239 = vmatpush1.msra.mxu0 0.0
        %240 = vmatprep.subr.mxu0 0.0
        %241 = vmatpush1.msra.mxu0 0.0
        %242 = vmatprep.subr.mxu0 0.0
        %243 = vmatpush1.msra.mxu0 0.0
        %244 = vmatprep.subr.mxu0 0.0
        %245 = vmatpush1.msra.mxu0 0.0
        %246 = vmatprep.subr.mxu0 0.0
        %247 = vmatpush1.msra.mxu0 0.0
        %248 = vmatprep.subr.mxu0 0.0
        %249 = vmatpush1.msra.mxu0 0.0
        %250 = vmatprep.subr.mxu0 0.0
        %251 = vmatpush1.msra.mxu0 0.0
        %252 = vmatprep.subr.mxu0 0.0
        %253 = vmatpush1.msra.mxu0 0.0
        %254 = vmatprep.subr.mxu0 0.0
        %255 = vmatpush1.msra.mxu0 0.0
        %256 = vmatprep.subr.mxu0 0.0
        %257 = vmatpush1.msra.mxu0 0.0
        %258 = vmatprep.subr.mxu0 0.0
        %259 = vmatpush1.msra.mxu0 0.0
        %260 = vmatprep.subr.mxu0 0.0
        %261 = vmatpush1.msra.mxu0 0.0
        %262 = vmatprep.subr.mxu0 0.0
        %263 = vmatpush1.msra.mxu0 0.0
        %264 = vmatprep.subr.mxu0 0.0
        %265 = vmatpush1.msra.mxu0 0.0
        %266 = vmatprep.subr.mxu0 0.0
        %267 = vmatpush1.msra.mxu0 0.0
        %268 = vmatprep.subr.mxu0 0.0
        %269 = vmatpush1.msra.mxu0 0.0
        %270 = vmatprep.subr.mxu0 0.0
        %271 = vmatpush1.msra.mxu0 0.0
        %272 = vmatprep.mubr.f32.mxu0 0.0
        %273 = vmatmul.mubr.f32.gmra.mrb[0].mxu0 %v206
        %v274 = vpop.f32.mrb[0].mxu0
        %v275 = vadd.f32 0.0, %v274
        %v276 = vpop.f32.mrb[0].mxu0
        %277 = vdwg.mxu0
        %278 = vadd.xlane.f32.xlu0 %v275
        %v279 = vpop.xlane.xlu0 %278
        %v280 = vmul.f32 %v279, 0.03125
        %v281 = vmul.f32 %v275, %v275
        %282 = vadd.xlane.f32.xlu0 %v281
        %v283 = vpop.xlane.xlu0 %282
        %v284 = vmul.f32 %v283, 0.03125
        %v285 = vmul.f32 %v280, %v280
        %v286 = vsub.f32 %v284, %v285
        %v287 = vmax.f32 %v286, 0.0
        %v288 = vadd.f32 %v287, 1e-05
        %v289 = vrsqrt.pop %v288
        %v290 = vsub.f32 %v275, %v280
        %v291 = vmul.f32 %v290, %v289
        %v292 = vld [vmem:[%s2] sm:$0x1]
        %v294 = vlaneseq
        %v295 = vshrl.u32 %v294, 7
        %v296 = vsub.s32 0, %v295
        %v297 = vrot.slane %v292, %v296
        %v299 = vmul.f32 %v291, %v297
        %v300 = vld [vmem:[%s3] sm:$0x1]
        %v302 = vlaneseq
        %v303 = vshrl.u32 %v302, 7
        %v304 = vsub.s32 0, %v303
        %v305 = vrot.slane %v300, %v304
        %v307 = vadd.f32 %v299, %v305
        %308 = vst [vmem:[%s188] sm:$0xff] %v307
        %s309 = sand.u32 %s115, 1
        %s310 = scalar_lea.sflag [#allocation3], %s309
        %s311 = sand.u32 %s115, 1
        %s312 = smul.addr %s311, 8
        %s313 = scalar_lea.vmem [#allocation2], %s312
        // Predicated region
        $region37: #{_fused_embed_layernorm.1} parent=35 // pred_check
          %p314 = pneg %p125
        $region38: #{_fused_embed_layernorm.1} parent=35 // pred_check_branch
          %316 = sbr.rel (%p314) target = $region40
        $region39: #{_fused_embed_layernorm.1} parent=35 // pred_region
          %s318 = ssub.s32 128, 128
          %319 = vsyncadd %s310, %s318
          %s320 = smul.addr %s18, 128
          %s321 = scalar_lea.hbm %s4, %s320
          %s323 = sshll.u32 %s313, 4
          %s324 = int_to_ptr.vmem [resolvable:$true] %s323
          %326 = dma.vmem_to_hbm [thread:$0]  %s324, 128, %s321, %s310
        $region40: #{_fused_embed_layernorm.1} parent=35 // pred_fallthru
          _
      $region36: #{_fused_embed_layernorm.1} parent=5 // pred_fallthru
        _
      %p327 = scmp.le.s32.totalorder 2, %s13
      // Predicated region
      $region41: #{_fused_embed_layernorm.1} parent=5 // pred_check
        %p328 = pneg %p327
      $region42: #{_fused_embed_layernorm.1} parent=5 // pred_check_branch
        %330 = sbr.rel (%p328) target = $region44
      $region43: #{_fused_embed_layernorm.1} parent=5 // pred_region
        %s331 = ssub.s32 %s13, 2
        // Predicated region
        $region45: #{_fused_embed_layernorm.1} parent=43 // pred_check
          %p332 = pneg %p131
        $region46: #{_fused_embed_layernorm.1} parent=43 // pred_check_branch
          %334 = sbr.rel (%p332) target = $region48
        $region47: #{_fused_embed_layernorm.1} parent=43 // pred_region
          %s335 = sand.u32 %s116, 1
          %s336 = scalar_lea.sflag [#allocation3], %s335
          %s337 = sand.u32 %s116, 1
          %s338 = smul.addr %s337, 8
          %s339 = scalar_lea.vmem [#allocation2], %s338
          %340 = dma.done %s336, 128
        $region48: #{_fused_embed_layernorm.1} parent=43 // pred_fallthru
          _
      $region44: #{_fused_embed_layernorm.1} parent=5 // pred_fallthru
        _
    $region6: #{_fused_embed_layernorm.1} parent=1 // loop_footer
      %s17 = sadd.s32 1, %s13
    $region7: #{_fused_embed_layernorm.1} parent=1 // loop_footer_branch
      %12 = sbr.rel target = $region3
    $region8: #{_fused_embed_layernorm.1} parent=1 // loop_exit
      _
    %341 = vsyncpa [#allocation3], 1
    %s342 = scalar_lea.sflag [#allocation3], 1
    %343 = vsyncpa %s342, 1

</llo_original>
